<compile_context>
chip_gen: v7x
topology: tpu7x:2x2x1
jax: 0.10.0
libtpu: 0.0.40
codegen_flags: <defaults>
</compile_context>

<pallas_src>
import jax
import jax.numpy as jnp
from jax.experimental import pallas as pl
from jax.experimental.pallas import tpu as pltpu


def _round_up(x, m):
    return ((x + m - 1) // m) * m


def generator_kernel(x_ref, w1_ref, b1_ref, w2_ref, b2_ref, o_ref):
    # First linear layer (MXU, bf16 inputs, f32 accumulate) + LeakyReLU(0.01) (VPU)
    h = jnp.dot(x_ref[...], w1_ref[...], preferred_element_type=jnp.float32)
    h = h + b1_ref[...]                       # b1 is [1, H], broadcasts over batch
    h = jnp.where(h >= 0.0, h, 0.01 * h)      # LeakyReLU(negative_slope=0.01)

    # Second linear layer (MXU, bf16 inputs, f32 accumulate) + Tanh (EUP)
    y = jnp.dot(h.astype(jnp.bfloat16), w2_ref[...],
                preferred_element_type=jnp.float32)
    y = y + b2_ref[...]                       # b2 is [1, Dp]
    o_ref[...] = jnp.tanh(y).astype(o_ref.dtype)


def generator_forward(x, params, *, img_dim, block_b=128):
    """x: [B, Z] f32.  params = (w1 [Zp,H] bf16, b1 [1,H] f32,
                                 w2 [H,Dp] bf16, b2 [1,Dp] f32).
    Returns [B, img_dim] f32."""
    w1, b1, w2, b2 = params
    B, Z = x.shape
    Zp, H = w1.shape
    Dp = w2.shape[1]

    # Choose the batch tile: one full (sublane-aligned) tile for small batches,
    # 128-row tiles streamed over a "parallel" grid axis otherwise.
    if B <= block_b:
        TB = _round_up(max(B, 1), 16)
    else:
        TB = block_b
    Bp = _round_up(B, TB)
    grid_b = Bp // TB

    # Pad x: batch to Bp, features to Zp (zero rows/cols are exact no-ops for
    # the matmul), cast to bf16 to halve the activation DMA as well.
    xp = jnp.pad(x.astype(jnp.bfloat16), ((0, Bp - B), (0, Zp - Z)))

    out_padded = pl.pallas_call(
        generator_kernel,
        out_shape=jax.ShapeDtypeStruct((Bp, Dp), jnp.float32),
        grid_spec=pltpu.PrefetchScalarGridSpec(
            num_scalar_prefetch=0,
            grid=(grid_b,),
            in_specs=[
                # activations stream per batch tile
                pl.BlockSpec((TB, Zp), lambda i: (i, 0)),
                # weights/biases: same block every step -> fetched once, VMEM-resident
                pl.BlockSpec((Zp, H), lambda i: (0, 0)),
                pl.BlockSpec((1, H), lambda i: (0, 0)),
                pl.BlockSpec((H, Dp), lambda i: (0, 0)),
                pl.BlockSpec((1, Dp), lambda i: (0, 0)),
            ],
            out_specs=pl.BlockSpec((TB, Dp), lambda i: (i, 0)),
        ),
        compiler_params=pltpu.CompilerParams(
            # batch tiles are independent -> shard across TensorCores on v7x
            dimension_semantics=("parallel",),
        ),
    )(xp, w1, b1, w2, b2)

    # Slice back to the logical output shape.
    return out_padded[:B, :img_dim]


def init_generator_params(key, z_dim, hidden, img_dim):
    """PyTorch-style nn.Linear init (U[-1/sqrt(fan_in), 1/sqrt(fan_in)]),
    then padded to lane-friendly shapes and weights cast to bf16."""
    k1, k2, k3, k4 = jax.random.split(key, 4)
    bound1 = 1.0 / jnp.sqrt(z_dim)
    bound2 = 1.0 / jnp.sqrt(hidden)
    w1 = jax.random.uniform(k1, (z_dim, hidden), jnp.float32, -bound1, bound1)
    b1 = jax.random.uniform(k2, (1, hidden), jnp.float32, -bound1, bound1)
    w2 = jax.random.uniform(k3, (hidden, img_dim), jnp.float32, -bound2, bound2)
    b2 = jax.random.uniform(k4, (1, img_dim), jnp.float32, -bound2, bound2)

    z_pad = _round_up(z_dim, 128)    # 64  -> 128
    d_pad = _round_up(img_dim, 128)  # 784 -> 896
    w1p = jnp.pad(w1, ((0, z_pad - z_dim), (0, 0))).astype(jnp.bfloat16)
    w2p = jnp.pad(w2, ((0, 0), (0, d_pad - img_dim))).astype(jnp.bfloat16)
    b2p = jnp.pad(b2, ((0, 0), (0, d_pad - img_dim)))
    return (w1p, b1, w2p, b2p)


if __name__ == "__main__":
    z_dim = 64       # latent dim (as in the reference script)
    hidden = 256     # hidden width of the generator MLP
    img_dim = 784    # 28*28 MNIST-style flattened image

    key = jax.random.PRNGKey(0)
    k_x1, k_x2, k_p = jax.random.split(key, 3)
    params = init_generator_params(k_p, z_dim, hidden, img_dim)

    def reference(x):
        # Pure-JAX reference replicating the kernel's bf16 quantization steps.
        w1, b1, w2, b2 = params
        xq = x.astype(jnp.bfloat16).astype(jnp.float32)
        h = xq @ w1[:z_dim].astype(jnp.float32) + b1
        h = jnp.where(h >= 0.0, h, 0.01 * h)
        hq = h.astype(jnp.bfloat16).astype(jnp.float32)
        y = hq @ w2[:, :img_dim].astype(jnp.float32) + b2[:, :img_dim]
        return jnp.tanh(y)

    # Small-batch case (single batch tile).
    x_small = jax.random.normal(k_x1, (8, z_dim), dtype=jnp.float32)
    out_small = jax.block_until_ready(
        generator_forward(x_small, params, img_dim=img_dim))
    assert out_small.shape == (8, img_dim)
    assert jnp.allclose(out_small, reference(x_small), atol=2e-3)

    # Batched case exercising the batch grid (2 tiles of 128 rows, "parallel").
    x_big = jax.random.normal(k_x2, (256, z_dim), dtype=jnp.float32)
    out_big = jax.block_until_ready(
        generator_forward(x_big, params, img_dim=img_dim))
    assert out_big.shape == (256, img_dim)
    assert jnp.allclose(out_big, reference(x_big), atol=2e-3)

    print("KERNEL_OK")
</pallas_src>

<mosaic_0001>
module attributes {stable_mosaic.version = 11 : i64} {
  func.func @generator_kernel(%arg0: i32, %arg1: memref<16x128xbf16, #tpu.memory_space<vmem>>, %arg2: memref<128x256xbf16, #tpu.memory_space<vmem>>, %arg3: memref<1x256xf32, #tpu.memory_space<vmem>>, %arg4: memref<256x896xbf16, #tpu.memory_space<vmem>>, %arg5: memref<1x896xf32, #tpu.memory_space<vmem>>, %arg6: memref<16x896xf32, #tpu.memory_space<vmem>>) attributes {dimension_semantics = [#tpu.dimension_semantics<parallel>], iteration_bounds = array<i64: 1>, scalar_prefetch = 0 : i64, scratch_operands = 0 : i64, tpu.core_type = #tpu.core_type<tc>, window_params = [{transform_indices = @transform_0, window_bounds = array<i64: 16, 128>}, {pipeline_mode = #tpu.pipeline_mode<synchronous>, transform_indices = @transform_1, window_bounds = array<i64: 128, 256>}, {pipeline_mode = #tpu.pipeline_mode<synchronous>, transform_indices = @transform_2, window_bounds = array<i64: 1, 256>}, {pipeline_mode = #tpu.pipeline_mode<synchronous>, transform_indices = @transform_3, window_bounds = array<i64: 256, 896>}, {pipeline_mode = #tpu.pipeline_mode<synchronous>, transform_indices = @transform_4, window_bounds = array<i64: 1, 896>}, {transform_indices = @transform_5, window_bounds = array<i64: 16, 896>}]} {
    %c0 = arith.constant 0 : index
    %c0_0 = arith.constant 0 : index
    %0 = vector.load %arg1[%c0, %c0_0] : memref<16x128xbf16, #tpu.memory_space<vmem>>, vector<16x128xbf16>
    %c0_1 = arith.constant 0 : index
    %c0_2 = arith.constant 0 : index
    %1 = vector.load %arg2[%c0_1, %c0_2] : memref<128x256xbf16, #tpu.memory_space<vmem>>, vector<128x256xbf16>
    %cst = arith.constant dense<0.000000e+00> : vector<16x256xf32>
    %2 = tpu.matmul %0, %1, %cst {dimension_numbers = #tpu.dot_dimension_numbers<[1], [0], [0], [1], [0, 0, 1, 1], [], []>} : vector<16x128xbf16>, vector<128x256xbf16>, vector<16x256xf32> -> vector<16x256xf32>
    %c0_3 = arith.constant 0 : index
    %c0_4 = arith.constant 0 : index
    %3 = vector.load %arg3[%c0_3, %c0_4] : memref<1x256xf32, #tpu.memory_space<vmem>>, vector<1x256xf32>
    %4 = vector.broadcast %3 : vector<1x256xf32> to vector<16x256xf32>
    %5 = arith.addf %2, %4 : vector<16x256xf32>
    %cst_5 = arith.constant 0.000000e+00 : f32
    %6 = vector.broadcast %cst_5 : f32 to vector<16x256xf32>
    %7 = arith.cmpf oge, %5, %6 : vector<16x256xf32>
    %cst_6 = arith.constant 0.00999999977 : f32
    %8 = vector.broadcast %cst_6 : f32 to vector<16x256xf32>
    %9 = arith.mulf %8, %5 : vector<16x256xf32>
    %10 = arith.select %7, %5, %9 : vector<16x256xi1>, vector<16x256xf32>
    %11 = arith.truncf %10 : vector<16x256xf32> to vector<16x256xbf16>
    %c0_7 = arith.constant 0 : index
    %c0_8 = arith.constant 0 : index
    %12 = vector.load %arg4[%c0_7, %c0_8] : memref<256x896xbf16, #tpu.memory_space<vmem>>, vector<256x896xbf16>
    %cst_9 = arith.constant dense<0.000000e+00> : vector<16x896xf32>
    %13 = tpu.matmul %11, %12, %cst_9 {dimension_numbers = #tpu.dot_dimension_numbers<[1], [0], [0], [1], [0, 0, 1, 1], [], []>} : vector<16x256xbf16>, vector<256x896xbf16>, vector<16x896xf32> -> vector<16x896xf32>
    %c0_10 = arith.constant 0 : index
    %c0_11 = arith.constant 0 : index
    %14 = vector.load %arg5[%c0_10, %c0_11] : memref<1x896xf32, #tpu.memory_space<vmem>>, vector<1x896xf32>
    %15 = vector.broadcast %14 : vector<1x896xf32> to vector<16x896xf32>
    %16 = arith.addf %13, %15 : vector<16x896xf32>
    %17 = math.tanh %16 : vector<16x896xf32>
    %c0_12 = arith.constant 0 : index
    %c0_13 = arith.constant 0 : index
    %18 = vector.load %arg6[%c0_12, %c0_13] : memref<16x896xf32, #tpu.memory_space<vmem>>, vector<16x896xf32>
    tpu.vector_store %arg6[%c0_12, %c0_13], %17 {strides = array<i32>} : memref<16x896xf32, #tpu.memory_space<vmem>>, vector<16x896xf32>,
    return
  }
  func.func @transform_0(%arg0: i32) -> (i32, i32) {
    %c0_i32 = arith.constant 0 : i32
    %c0_i32_0 = arith.constant 0 : i32
    return %arg0, %c0_i32 : i32, i32
  }
  func.func @transform_1(%arg0: i32) -> (i32, i32) {
    %c0_i32 = arith.constant 0 : i32
    %c0_i32_0 = arith.constant 0 : i32
    %c0_i32_1 = arith.constant 0 : i32
    return %c0_i32, %c0_i32_0 : i32, i32
  }
  func.func @transform_2(%arg0: i32) -> (i32, i32) {
    %c0_i32 = arith.constant 0 : i32
    %c0_i32_0 = arith.constant 0 : i32
    %c0_i32_1 = arith.constant 0 : i32
    return %c0_i32, %c0_i32_0 : i32, i32
  }
  func.func @transform_3(%arg0: i32) -> (i32, i32) {
    %c0_i32 = arith.constant 0 : i32
    %c0_i32_0 = arith.constant 0 : i32
    %c0_i32_1 = arith.constant 0 : i32
    return %c0_i32, %c0_i32_0 : i32, i32
  }
  func.func @transform_4(%arg0: i32) -> (i32, i32) {
    %c0_i32 = arith.constant 0 : i32
    %c0_i32_0 = arith.constant 0 : i32
    %c0_i32_1 = arith.constant 0 : i32
    return %c0_i32, %c0_i32_0 : i32, i32
  }
  func.func @transform_5(%arg0: i32) -> (i32, i32) {
    %c0_i32 = arith.constant 0 : i32
    %c0_i32_0 = arith.constant 0 : i32
    return %arg0, %c0_i32 : i32, i32
  }
}

</mosaic_0001>

<llo_original>
// kernel: tpu_custom_call.1
$region0: #{tpu_custom_call.1}
  #allocation0 [shape = 'u32[]', space=smem, size = 0x4, offset = 0x4, fixed_abs, tag = 'smem constant byte address 0x4 - core index']
  #allocation1 [shape = 'u32[144,128]{1,0:T(1,128)}', space=vmem, size = 0x12000, scoped, tag = 'internal scratch']
  %s0 = inlined_call_operand.hbm [shape: bf16[16,128], index: 0, kind: input, shape index: {}]
  %s1 = inlined_call_operand.hbm [shape: bf16[128,256], index: 1, kind: input, shape index: {}]
  %s2 = inlined_call_operand.vmem [shape: f32[1,256], index: 2, kind: input, shape index: {}]
  %s3 = inlined_call_operand.hbm [shape: bf16[256,896], index: 3, kind: input, shape index: {}]
  %s4 = inlined_call_operand.vmem [shape: f32[1,896], index: 4, kind: input, shape index: {}]
  %s5 = inlined_call_operand.hbm [shape: f32[16,896], index: 5, kind: output, shape index: {}]
  %s6 = sld [smem:[#allocation0]]
  $region42: #{tpu_custom_call.1} parent=0
    _
  %s8 = ssub.s32 1, %s6
  %s9 = scalar_select 0, %s8, %s6
  $region1: #{tpu_custom_call.1} parent=0
    #allocation2 [shape = 'u8[4096]{0}', space=vmem, size = 0x1000, scoped, tag = 'input window, operand 0, single buffered']
    #allocation3 [shape = 's32[1]{0}', space=sflag, size = 0x4, scoped, tag = 'scoped memory for tpu_custom_call.1']
    #allocation4 [shape = 's32[1]{0}', space=sflag, size = 0x4, scoped, tag = 'scoped memory for tpu_custom_call.1']
    #allocation5 [shape = 'u8[65536]{0}', space=vmem, size = 0x10000, scoped, tag = 'input window, operand 1, single buffered']
    #allocation6 [shape = 's32[1]{0}', space=sflag, size = 0x4, scoped, tag = 'scoped memory for tpu_custom_call.1']
    #allocation7 [shape = 'u8[458752]{0}', space=vmem, size = 0x70000, scoped, tag = 'input window, operand 3, single buffered']
    #allocation8 [shape = 'u8[57344]{0}', space=vmem, size = 0xe000, scoped, tag = 'output window, operand 0, single buffered']
    %10 = vsyncpa [#allocation3], 0
    %11 = vsyncpa [#allocation6], 0
    %12 = vsyncpa [#allocation4], 0
    // Predicated region
    $region2: #{tpu_custom_call.1} parent=1 // pred_check
      _
    $region3: #{tpu_custom_call.1} parent=1 // pred_check_branch
      %14 = sbr.rel (0) target = $region5
    $region4: #{tpu_custom_call.1} parent=1 // pred_region
      %s16 = ssub.s32 128, 128
      %17 = vsyncadd [#allocation3], %s16
      %s18 = sshll.u32 [#allocation2], 4
      %s19 = int_to_ptr.vmem [resolvable:$true] %s18
      %24 = dma.hbm_to_vmem [thread:$0]  %s0, 128, %s19, [#allocation3], 64, 64, 4
    $region5: #{tpu_custom_call.1} parent=1 // pred_fallthru
      _
    // Predicated region
    $region6: #{tpu_custom_call.1} parent=1 // pred_check
      _
    $region7: #{tpu_custom_call.1} parent=1 // pred_check_branch
      %26 = sbr.rel (0) target = $region9
    $region8: #{tpu_custom_call.1} parent=1 // pred_region
      %s28 = ssub.s32 2048, 2048
      %29 = vsyncadd [#allocation6], %s28
      %s30 = sshll.u32 [#allocation5], 4
      %s31 = int_to_ptr.vmem [resolvable:$true] %s30
      %36 = dma.hbm_to_vmem [thread:$0]  %s1, 2048, %s31, [#allocation6], 128, 128, 8
    $region9: #{tpu_custom_call.1} parent=1 // pred_fallthru
      _
    // Predicated region
    $region10: #{tpu_custom_call.1} parent=1 // pred_check
      _
    $region11: #{tpu_custom_call.1} parent=1 // pred_check_branch
      %38 = sbr.rel (0) target = $region13
    $region12: #{tpu_custom_call.1} parent=1 // pred_region
      _
    $region13: #{tpu_custom_call.1} parent=1 // pred_fallthru
      _
    // Predicated region
    $region14: #{tpu_custom_call.1} parent=1 // pred_check
      _
    $region15: #{tpu_custom_call.1} parent=1 // pred_check_branch
      %40 = sbr.rel (0) target = $region17
    $region16: #{tpu_custom_call.1} parent=1 // pred_region
      %s42 = ssub.s32 14336, 14336
      %43 = vsyncadd [#allocation6], %s42
      %s44 = sshll.u32 [#allocation7], 4
      %s45 = int_to_ptr.vmem [resolvable:$true] %s44
      %50 = dma.hbm_to_vmem [thread:$0]  %s3, 14336, %s45, [#allocation6], 448, 448, 28
    $region17: #{tpu_custom_call.1} parent=1 // pred_fallthru
      _
    // Predicated region
    $region18: #{tpu_custom_call.1} parent=1 // pred_check
      _
    $region19: #{tpu_custom_call.1} parent=1 // pred_check_branch
      %52 = sbr.rel (0) target = $region21
    $region20: #{tpu_custom_call.1} parent=1 // pred_region
      _
    $region21: #{tpu_custom_call.1} parent=1 // pred_fallthru
      _
    // Predicated region
    $region22: #{tpu_custom_call.1} parent=1 // pred_check
      _
    $region23: #{tpu_custom_call.1} parent=1 // pred_check_branch
      %54 = sbr.rel (0) target = $region25
    $region24: #{tpu_custom_call.1} parent=1 // pred_region
      %55 = dma.done [#allocation3], 128
    $region25: #{tpu_custom_call.1} parent=1 // pred_fallthru
      _
    // Predicated region
    $region26: #{tpu_custom_call.1} parent=1 // pred_check
      _
    $region27: #{tpu_custom_call.1} parent=1 // pred_check_branch
      %57 = sbr.rel (0) target = $region29
    $region28: #{tpu_custom_call.1} parent=1 // pred_region
      %58 = dma.done [#allocation6], 2048
    $region29: #{tpu_custom_call.1} parent=1 // pred_fallthru
      _
    // Predicated region
    $region30: #{tpu_custom_call.1} parent=1 // pred_check
      _
    $region31: #{tpu_custom_call.1} parent=1 // pred_check_branch
      %60 = sbr.rel (0) target = $region33
    $region32: #{tpu_custom_call.1} parent=1 // pred_region
      %61 = dma.done [#allocation6], 14336
    $region33: #{tpu_custom_call.1} parent=1 // pred_fallthru
      _
    %v63 = vld [vmem:[#allocation2] sm:$0xf]
    %v64 = vld [vmem:[#allocation2 + $0x4] sm:$0xf]
    %v65 = vld [vmem:[#allocation5] sm:$0xff]
    %v66 = vld [vmem:[#allocation5 + $0x8] sm:$0xff]
    %v67 = vld [vmem:[#allocation5 + $0x10] sm:$0xff]
    %v68 = vld [vmem:[#allocation5 + $0x18] sm:$0xff]
    %v69 = vld [vmem:[#allocation5 + $0x20] sm:$0xff]
    %v70 = vld [vmem:[#allocation5 + $0x28] sm:$0xff]
    %v71 = vld [vmem:[#allocation5 + $0x30] sm:$0xff]
    %v72 = vld [vmem:[#allocation5 + $0x38] sm:$0xff]
    %v73 = vld [vmem:[#allocation5 + $0x40] sm:$0xff]
    %v74 = vld [vmem:[#allocation5 + $0x48] sm:$0xff]
    %v75 = vld [vmem:[#allocation5 + $0x50] sm:$0xff]
    %v76 = vld [vmem:[#allocation5 + $0x58] sm:$0xff]
    %v77 = vld [vmem:[#allocation5 + $0x60] sm:$0xff]
    %v78 = vld [vmem:[#allocation5 + $0x68] sm:$0xff]
    %v79 = vld [vmem:[#allocation5 + $0x70] sm:$0xff]
    %v80 = vld [vmem:[#allocation5 + $0x78] sm:$0xff]
    %v81 = vld [vmem:[%s2] sm:$0x3]
    %v83 = vlaneseq
    %v84 = vshrl.u32 %v83, 7
    %v85 = vsub.s32 0, %v84
    %v86 = vrot.slane %v81, %v85
    %v87 = vlaneseq
    %v88 = vshrl.u32 %v87, 7
    %v89 = vsub.s32 1, %v88
    %v90 = vrot.slane %v81, %v89
    %v95 = vunpack.c.l.b16 %v63
    %v96 = vunpack.c.l.b16 %v64
    %v97 = vpack.c.b16 %v96, %v95
    %v115 = vunpack.c.l.b16 %v65
    %v116 = vunpack.c.h.b16 %v65
    %v117 = vunpack.c.l.b16 %v66
    %v118 = vunpack.c.h.b16 %v66
    %v119 = vunpack.c.l.b16 %v67
    %v120 = vunpack.c.h.b16 %v67
    %v121 = vunpack.c.l.b16 %v68
    %v122 = vunpack.c.h.b16 %v68
    %v123 = vunpack.c.l.b16 %v69
    %v124 = vunpack.c.h.b16 %v69
    %v125 = vunpack.c.l.b16 %v70
    %v126 = vunpack.c.h.b16 %v70
    %v127 = vunpack.c.l.b16 %v71
    %v128 = vunpack.c.h.b16 %v71
    %v129 = vunpack.c.l.b16 %v72
    %v130 = vunpack.c.h.b16 %v72
    %v131 = vunpack.c.l.b16 %v73
    %v132 = vunpack.c.h.b16 %v73
    %v133 = vunpack.c.l.b16 %v74
    %v134 = vunpack.c.h.b16 %v74
    %v135 = vunpack.c.l.b16 %v75
    %v136 = vunpack.c.h.b16 %v75
    %v137 = vunpack.c.l.b16 %v76
    %v138 = vunpack.c.h.b16 %v76
    %v139 = vunpack.c.l.b16 %v77
    %v140 = vunpack.c.h.b16 %v77
    %v141 = vunpack.c.l.b16 %v78
    %v142 = vunpack.c.h.b16 %v78
    %v143 = vunpack.c.l.b16 %v79
    %v144 = vunpack.c.h.b16 %v79
    %v145 = vunpack.c.l.b16 %v80
    %v146 = vunpack.c.h.b16 %v80
    %v147 = vpack.c.b16 %v117, %v115
    %v148 = vpack.c.b16 %v118, %v116
    %v149 = vpack.c.b16 %v121, %v119
    %v150 = vpack.c.b16 %v122, %v120
    %v151 = vpack.c.b16 %v125, %v123
    %v152 = vpack.c.b16 %v126, %v124
    %v153 = vpack.c.b16 %v129, %v127
    %v154 = vpack.c.b16 %v130, %v128
    %v155 = vpack.c.b16 %v133, %v131
    %v156 = vpack.c.b16 %v134, %v132
    %v157 = vpack.c.b16 %v137, %v135
    %v158 = vpack.c.b16 %v138, %v136
    %v159 = vpack.c.b16 %v141, %v139
    %v160 = vpack.c.b16 %v142, %v140
    %v161 = vpack.c.b16 %v145, %v143
    %v162 = vpack.c.b16 %v146, %v144
    %179 = vmatprep.subr.bf16.mxu0 %v148
    %180 = vmatpush1.bf16.msra.mxu0 %v147
    %181 = vmatprep.subr.bf16.mxu0 %v150
    %182 = vmatpush1.bf16.msra.mxu0 %v149
    %183 = vmatprep.subr.bf16.mxu0 %v152
    %184 = vmatpush1.bf16.msra.mxu0 %v151
    %185 = vmatprep.subr.bf16.mxu0 %v154
    %186 = vmatpush1.bf16.msra.mxu0 %v153
    %187 = vmatprep.subr.bf16.mxu0 %v156
    %188 = vmatpush1.bf16.msra.mxu0 %v155
    %189 = vmatprep.subr.bf16.mxu0 %v158
    %190 = vmatpush1.bf16.msra.mxu0 %v157
    %191 = vmatprep.subr.bf16.mxu0 %v160
    %192 = vmatpush1.bf16.msra.mxu0 %v159
    %193 = vmatprep.subr.bf16.mxu0 %v162
    %194 = vmatpush1.bf16.msra.mxu0 %v161
    %195 = vmatprep.subr.bf16.mxu0 0
    %196 = vmatpush1.bf16.msra.mxu0 0
    %197 = vmatprep.subr.bf16.mxu0 0
    %198 = vmatpush1.bf16.msra.mxu0 0
    %199 = vmatprep.subr.bf16.mxu0 0
    %200 = vmatpush1.bf16.msra.mxu0 0
    %201 = vmatprep.subr.bf16.mxu0 0
    %202 = vmatpush1.bf16.msra.mxu0 0
    %203 = vmatprep.subr.bf16.mxu0 0
    %204 = vmatpush1.bf16.msra.mxu0 0
    %205 = vmatprep.subr.bf16.mxu0 0
    %206 = vmatpush1.bf16.msra.mxu0 0
    %207 = vmatprep.subr.bf16.mxu0 0
    %208 = vmatpush1.bf16.msra.mxu0 0
    %209 = vmatprep.subr.bf16.mxu0 0
    %210 = vmatpush1.bf16.msra.mxu0 0
    %211 = vmatprep.mubr.bf16.mxu0 0
    %212 = vmatmul.mubr.bf16.gmra.mrb[0].mxu0 %v97
    %v213 = vpop.f32.mrb[0].mxu0
    %v214 = vadd.f32 %v86, %v213
    %v215 = vpop.f32.mrb[0].mxu0
    %v216 = vadd.f32 %v90, %v215
    %v217 = vpop.f32.mrb[0].mxu0
    %v218 = vadd.f32 %v86, %v217
    %v219 = vpop.f32.mrb[0].mxu0
    %v220 = vadd.f32 %v90, %v219
    %221 = vdwg.mxu0
    %vm222 = vcmp.ge.f32.partialorder %v214, 0.0
    %vm223 = vcmp.ge.f32.partialorder %v216, 0.0
    %vm224 = vcmp.ge.f32.partialorder %v218, 0.0
    %vm225 = vcmp.ge.f32.partialorder %v220, 0.0
    %v226 = vmul.f32 %v214, 0.01
    %v227 = vmul.f32 %v216, 0.01
    %v228 = vmul.f32 %v218, 0.01
    %v229 = vmul.f32 %v220, 0.01
    %v230 = vsel %vm222, %v214, %v226
    %v231 = vsel %vm223, %v216, %v227
    %v232 = vsel %vm224, %v218, %v228
    %v233 = vsel %vm225, %v220, %v229
    %v234 = vpack.c.bf16 %v232, %v230
    %v235 = vpack.c.bf16 %v233, %v231
    %v236 = vld [vmem:[#allocation7] sm:$0xff]
    %v237 = vld [vmem:[#allocation7 + $0x8] sm:$0xff]
    %v238 = vld [vmem:[#allocation7 + $0x10] sm:$0xff]
    %v239 = vld [vmem:[#allocation7 + $0x18] sm:$0xf]
    %v240 = vld [vmem:[#allocation7 + $0x1c] sm:$0xff]
    %v241 = vld [vmem:[#allocation7 + $0x24] sm:$0xff]
    %v242 = vld [vmem:[#allocation7 + $0x2c] sm:$0xff]
    %v243 = vld [vmem:[#allocation7 + $0x34] sm:$0xf]
    %v244 = vld [vmem:[#allocation7 + $0x38] sm:$0xff]
    %v245 = vld [vmem:[#allocation7 + $0x40] sm:$0xff]
    %v246 = vld [vmem:[#allocation7 + $0x48] sm:$0xff]
    %v247 = vld [vmem:[#allocation7 + $0x50] sm:$0xf]
    %v248 = vld [vmem:[#allocation7 + $0x54] sm:$0xff]
    %v249 = vld [vmem:[#allocation7 + $0x5c] sm:$0xff]
    %v250 = vld [vmem:[#allocation7 + $0x64] sm:$0xff]
    %v251 = vld [vmem:[#allocation7 + $0x6c] sm:$0xf]
    %v252 = vld [vmem:[#allocation7 + $0x70] sm:$0xff]
    %v253 = vld [vmem:[#allocation7 + $0x78] sm:$0xff]
    %v254 = vld [vmem:[#allocation7 + $0x80] sm:$0xff]
    %v255 = vld [vmem:[#allocation7 + $0x88] sm:$0xf]
    %v256 = vld [vmem:[#allocation7 + $0x8c] sm:$0xff]
    %v257 = vld [vmem:[#allocation7 + $0x94] sm:$0xff]
    %v258 = vld [vmem:[#allocation7 + $0x9c] sm:$0xff]
    %v259 = vld [vmem:[#allocation7 + $0xa4] sm:$0xf]
    %v260 = vld [vmem:[#allocation7 + $0xa8] sm:$0xff]
    %v261 = vld [vmem:[#allocation7 + $0xb0] sm:$0xff]
    %v262 = vld [vmem:[#allocation7 + $0xb8] sm:$0xff]
    %v263 = vld [vmem:[#allocation7 + $0xc0] sm:$0xf]
    %v264 = vld [vmem:[#allocation7 + $0xc4] sm:$0xff]
    %v265 = vld [vmem:[#allocation7 + $0xcc] sm:$0xff]
    %v266 = vld [vmem:[#allocation7 + $0xd4] sm:$0xff]
    %v267 = vld [vmem:[#allocation7 + $0xdc] sm:$0xf]
    %v268 = vld [vmem:[#allocation7 + $0xe0] sm:$0xff]
    %v269 = vld [vmem:[#allocation7 + $0xe8] sm:$0xff]
    %v270 = vld [vmem:[#allocation7 + $0xf0] sm:$0xff]
    %v271 = vld [vmem:[#allocation7 + $0xf8] sm:$0xf]
    %v272 = vld [vmem:[#allocation7 + $0xfc] sm:$0xff]
    %v273 = vld [vmem:[#allocation7 + $0x104] sm:$0xff]
    %v274 = vld [vmem:[#allocation7 + $0x10c] sm:$0xff]
    %v275 = vld [vmem:[#allocation7 + $0x114] sm:$0xf]
    %v276 = vld [vmem:[#allocation7 + $0x118] sm:$0xff]
    %v277 = vld [vmem:[#allocation7 + $0x120] sm:$0xff]
    %v278 = vld [vmem:[#allocation7 + $0x128] sm:$0xff]
    %v279 = vld [vmem:[#allocation7 + $0x130] sm:$0xf]
    %v280 = vld [vmem:[#allocation7 + $0x134] sm:$0xff]
    %v281 = vld [vmem:[#allocation7 + $0x13c] sm:$0xff]
    %v282 = vld [vmem:[#allocation7 + $0x144] sm:$0xff]
    %v283 = vld [vmem:[#allocation7 + $0x14c] sm:$0xf]
    %v284 = vld [vmem:[#allocation7 + $0x150] sm:$0xff]
    %v285 = vld [vmem:[#allocation7 + $0x158] sm:$0xff]
    %v286 = vld [vmem:[#allocation7 + $0x160] sm:$0xff]
    %v287 = vld [vmem:[#allocation7 + $0x168] sm:$0xf]
    %v288 = vld [vmem:[#allocation7 + $0x16c] sm:$0xff]
    %v289 = vld [vmem:[#allocation7 + $0x174] sm:$0xff]
    %v290 = vld [vmem:[#allocation7 + $0x17c] sm:$0xff]
    %v291 = vld [vmem:[#allocation7 + $0x184] sm:$0xf]
    %v292 = vld [vmem:[#allocation7 + $0x188] sm:$0xff]
    %v293 = vld [vmem:[#allocation7 + $0x190] sm:$0xff]
    %v294 = vld [vmem:[#allocation7 + $0x198] sm:$0xff]
    %v295 = vld [vmem:[#allocation7 + $0x1a0] sm:$0xf]
    %v296 = vld [vmem:[#allocation7 + $0x1a4] sm:$0xff]
    %v297 = vld [vmem:[#allocation7 + $0x1ac] sm:$0xff]
    %v298 = vld [vmem:[#allocation7 + $0x1b4] sm:$0xff]
    %v299 = vld [vmem:[#allocation7 + $0x1bc] sm:$0xf]
    %v300 = vld [vmem:[#allocation7 + $0x1c0] sm:$0xff]
    %v301 = vld [vmem:[#allocation7 + $0x1c8] sm:$0xff]
    %v302 = vld [vmem:[#allocation7 + $0x1d0] sm:$0xff]
    %v303 = vld [vmem:[#allocation7 + $0x1d8] sm:$0xf]
    %v304 = vld [vmem:[#allocation7 + $0x1dc] sm:$0xff]
    %v305 = vld [vmem:[#allocation7 + $0x1e4] sm:$0xff]
    %v306 = vld [vmem:[#allocation7 + $0x1ec] sm:$0xff]
    %v307 = vld [vmem:[#allocation7 + $0x1f4] sm:$0xf]
    %v308 = vld [vmem:[#allocation7 + $0x1f8] sm:$0xff]
    %v309 = vld [vmem:[#allocation7 + $0x200] sm:$0xff]
    %v310 = vld [vmem:[#allocation7 + $0x208] sm:$0xff]
    %v311 = vld [vmem:[#allocation7 + $0x210] sm:$0xf]
    %v312 = vld [vmem:[#allocation7 + $0x214] sm:$0xff]
    %v313 = vld [vmem:[#allocation7 + $0x21c] sm:$0xff]
    %v314 = vld [vmem:[#allocation7 + $0x224] sm:$0xff]
    %v315 = vld [vmem:[#allocation7 + $0x22c] sm:$0xf]
    %v316 = vld [vmem:[#allocation7 + $0x230] sm:$0xff]
    %v317 = vld [vmem:[#allocation7 + $0x238] sm:$0xff]
    %v318 = vld [vmem:[#allocation7 + $0x240] sm:$0xff]
    %v319 = vld [vmem:[#allocation7 + $0x248] sm:$0xf]
    %v320 = vld [vmem:[#allocation7 + $0x24c] sm:$0xff]
    %v321 = vld [vmem:[#allocation7 + $0x254] sm:$0xff]
    %v322 = vld [vmem:[#allocation7 + $0x25c] sm:$0xff]
    %v323 = vld [vmem:[#allocation7 + $0x264] sm:$0xf]
    %v324 = vld [vmem:[#allocation7 + $0x268] sm:$0xff]
    %v325 = vld [vmem:[#allocation7 + $0x270] sm:$0xff]
    %v326 = vld [vmem:[#allocation7 + $0x278] sm:$0xff]
    %v327 = vld [vmem:[#allocation7 + $0x280] sm:$0xf]
    %v328 = vld [vmem:[#allocation7 + $0x284] sm:$0xff]
    %v329 = vld [vmem:[#allocation7 + $0x28c] sm:$0xff]
    %v330 = vld [vmem:[#allocation7 + $0x294] sm:$0xff]
    %v331 = vld [vmem:[#allocation7 + $0x29c] sm:$0xf]
    %v332 = vld [vmem:[#allocation7 + $0x2a0] sm:$0xff]
    %v333 = vld [vmem:[#allocation7 + $0x2a8] sm:$0xff]
    %v334 = vld [vmem:[#allocation7 + $0x2b0] sm:$0xff]
    %v335 = vld [vmem:[#allocation7 + $0x2b8] sm:$0xf]
    %v336 = vld [vmem:[#allocation7 + $0x2bc] sm:$0xff]
    %v337 = vld [vmem:[#allocation7 + $0x2c4] sm:$0xff]
    %v338 = vld [vmem:[#allocation7 + $0x2cc] sm:$0xff]
    %v339 = vld [vmem:[#allocation7 + $0x2d4] sm:$0xf]
    %v340 = vld [vmem:[#allocation7 + $0x2d8] sm:$0xff]
    %v341 = vld [vmem:[#allocation7 + $0x2e0] sm:$0xff]
    %v342 = vld [vmem:[#allocation7 + $0x2e8] sm:$0xff]
    %v343 = vld [vmem:[#allocation7 + $0x2f0] sm:$0xf]
    %v344 = vld [vmem:[#allocation7 + $0x2f4] sm:$0xff]
    %v345 = vld [vmem:[#allocation7 + $0x2fc] sm:$0xff]
    %v346 = vld [vmem:[#allocation7 + $0x304] sm:$0xff]
    %v347 = vld [vmem:[#allocation7 + $0x30c] sm:$0xf]
    %v348 = vld [vmem:[#allocation7 + $0x310] sm:$0xff]
    %v349 = vld [vmem:[#allocation7 + $0x318] sm:$0xff]
    %v350 = vld [vmem:[#allocation7 + $0x320] sm:$0xff]
    %v351 = vld [vmem:[#allocation7 + $0x328] sm:$0xf]
    %v352 = vld [vmem:[#allocation7 + $0x32c] sm:$0xff]
    %v353 = vld [vmem:[#allocation7 + $0x334] sm:$0xff]
    %v354 = vld [vmem:[#allocation7 + $0x33c] sm:$0xff]
    %v355 = vld [vmem:[#allocation7 + $0x344] sm:$0xf]
    %v356 = vld [vmem:[#allocation7 + $0x348] sm:$0xff]
    %v357 = vld [vmem:[#allocation7 + $0x350] sm:$0xff]
    %v358 = vld [vmem:[#allocation7 + $0x358] sm:$0xff]
    %v359 = vld [vmem:[#allocation7 + $0x360] sm:$0xf]
    %v360 = vld [vmem:[#allocation7 + $0x364] sm:$0xff]
    %v361 = vld [vmem:[#allocation7 + $0x36c] sm:$0xff]
    %v362 = vld [vmem:[#allocation7 + $0x374] sm:$0xff]
    %v363 = vld [vmem:[#allocation7 + $0x37c] sm:$0xf]
    %v364 = vld [vmem:[%s4] sm:$0xff]
    %v366 = vlaneseq
    %v367 = vshrl.u32 %v366, 7
    %v368 = vsub.s32 0, %v367
    %v369 = vrot.slane %v364, %v368
    %v370 = vlaneseq
    %v371 = vshrl.u32 %v370, 7
    %v372 = vsub.s32 1, %v371
    %v373 = vrot.slane %v364, %v372
    %v374 = vlaneseq
    %v375 = vshrl.u32 %v374, 7
    %v376 = vsub.s32 2, %v375
    %v377 = vrot.slane %v364, %v376
    %v378 = vlaneseq
    %v379 = vshrl.u32 %v378, 7
    %v380 = vsub.s32 3, %v379
    %v381 = vrot.slane %v364, %v380
    %v382 = vlaneseq
    %v383 = vshrl.u32 %v382, 7
    %v384 = vsub.s32 4, %v383
    %v385 = vrot.slane %v364, %v384
    %v386 = vlaneseq
    %v387 = vshrl.u32 %v386, 7
    %v388 = vsub.s32 5, %v387
    %v389 = vrot.slane %v364, %v388
    %v390 = vlaneseq
    %v391 = vshrl.u32 %v390, 7
    %v392 = vsub.s32 6, %v391
    %v393 = vrot.slane %v364, %v392
    %v529 = vunpack.c.l.b16 %v236
    %v530 = vunpack.c.h.b16 %v236
    %v531 = vunpack.c.l.b16 %v237
    %v532 = vunpack.c.h.b16 %v237
    %v533 = vunpack.c.l.b16 %v238
    %v534 = vunpack.c.h.b16 %v238
    %v535 = vunpack.c.l.b16 %v239
    %v536 = vunpack.c.l.b16 %v240
    %v537 = vunpack.c.h.b16 %v240
    %v538 = vunpack.c.l.b16 %v241
    %v539 = vunpack.c.h.b16 %v241
    %v540 = vunpack.c.l.b16 %v242
    %v541 = vunpack.c.h.b16 %v242
    %v542 = vunpack.c.l.b16 %v243
    %v543 = vunpack.c.l.b16 %v244
    %v544 = vunpack.c.h.b16 %v244
    %v545 = vunpack.c.l.b16 %v245
    %v546 = vunpack.c.h.b16 %v245
    %v547 = vunpack.c.l.b16 %v246
    %v548 = vunpack.c.h.b16 %v246
    %v549 = vunpack.c.l.b16 %v247
    %v550 = vunpack.c.l.b16 %v248
    %v551 = vunpack.c.h.b16 %v248
    %v552 = vunpack.c.l.b16 %v249
    %v553 = vunpack.c.h.b16 %v249
    %v554 = vunpack.c.l.b16 %v250
    %v555 = vunpack.c.h.b16 %v250
    %v556 = vunpack.c.l.b16 %v251
    %v557 = vunpack.c.l.b16 %v252
    %v558 = vunpack.c.h.b16 %v252
    %v559 = vunpack.c.l.b16 %v253
    %v560 = vunpack.c.h.b16 %v253
    %v561 = vunpack.c.l.b16 %v254
    %v562 = vunpack.c.h.b16 %v254
    %v563 = vunpack.c.l.b16 %v255
    %v564 = vunpack.c.l.b16 %v256
    %v565 = vunpack.c.h.b16 %v256
    %v566 = vunpack.c.l.b16 %v257
    %v567 = vunpack.c.h.b16 %v257
    %v568 = vunpack.c.l.b16 %v258
    %v569 = vunpack.c.h.b16 %v258
    %v570 = vunpack.c.l.b16 %v259
    %v571 = vunpack.c.l.b16 %v260
    %v572 = vunpack.c.h.b16 %v260
    %v573 = vunpack.c.l.b16 %v261
    %v574 = vunpack.c.h.b16 %v261
    %v575 = vunpack.c.l.b16 %v262
    %v576 = vunpack.c.h.b16 %v262
    %v577 = vunpack.c.l.b16 %v263
    %v578 = vunpack.c.l.b16 %v264
    %v579 = vunpack.c.h.b16 %v264
    %v580 = vunpack.c.l.b16 %v265
    %v581 = vunpack.c.h.b16 %v265
    %v582 = vunpack.c.l.b16 %v266
    %v583 = vunpack.c.h.b16 %v266
    %v584 = vunpack.c.l.b16 %v267
    %v585 = vunpack.c.l.b16 %v268
    %v586 = vunpack.c.h.b16 %v268
    %v587 = vunpack.c.l.b16 %v269
    %v588 = vunpack.c.h.b16 %v269
    %v589 = vunpack.c.l.b16 %v270
    %v590 = vunpack.c.h.b16 %v270
    %v591 = vunpack.c.l.b16 %v271
    %v592 = vunpack.c.l.b16 %v272
    %v593 = vunpack.c.h.b16 %v272
    %v594 = vunpack.c.l.b16 %v273
    %v595 = vunpack.c.h.b16 %v273
    %v596 = vunpack.c.l.b16 %v274
    %v597 = vunpack.c.h.b16 %v274
    %v598 = vunpack.c.l.b16 %v275
    %v599 = vunpack.c.l.b16 %v276
    %v600 = vunpack.c.h.b16 %v276
    %v601 = vunpack.c.l.b16 %v277
    %v602 = vunpack.c.h.b16 %v277
    %v603 = vunpack.c.l.b16 %v278
    %v604 = vunpack.c.h.b16 %v278
    %v605 = vunpack.c.l.b16 %v279
    %v606 = vunpack.c.l.b16 %v280
    %v607 = vunpack.c.h.b16 %v280
    %v608 = vunpack.c.l.b16 %v281
    %v609 = vunpack.c.h.b16 %v281
    %v610 = vunpack.c.l.b16 %v282
    %v611 = vunpack.c.h.b16 %v282
    %v612 = vunpack.c.l.b16 %v283
    %v613 = vunpack.c.l.b16 %v284
    %v614 = vunpack.c.h.b16 %v284
    %v615 = vunpack.c.l.b16 %v285
    %v616 = vunpack.c.h.b16 %v285
    %v617 = vunpack.c.l.b16 %v286
    %v618 = vunpack.c.h.b16 %v286
    %v619 = vunpack.c.l.b16 %v287
    %v620 = vunpack.c.l.b16 %v288
    %v621 = vunpack.c.h.b16 %v288
    %v622 = vunpack.c.l.b16 %v289
    %v623 = vunpack.c.h.b16 %v289
    %v624 = vunpack.c.l.b16 %v290
    %v625 = vunpack.c.h.b16 %v290
    %v626 = vunpack.c.l.b16 %v291
    %v627 = vunpack.c.l.b16 %v292
    %v628 = vunpack.c.h.b16 %v292
    %v629 = vunpack.c.l.b16 %v293
    %v630 = vunpack.c.h.b16 %v293
    %v631 = vunpack.c.l.b16 %v294
    %v632 = vunpack.c.h.b16 %v294
    %v633 = vunpack.c.l.b16 %v295
    %v634 = vunpack.c.l.b16 %v296
    %v635 = vunpack.c.h.b16 %v296
    %v636 = vunpack.c.l.b16 %v297
    %v637 = vunpack.c.h.b16 %v297
    %v638 = vunpack.c.l.b16 %v298
    %v639 = vunpack.c.h.b16 %v298
    %v640 = vunpack.c.l.b16 %v299
    %v641 = vunpack.c.l.b16 %v300
    %v642 = vunpack.c.h.b16 %v300
    %v643 = vunpack.c.l.b16 %v301
    %v644 = vunpack.c.h.b16 %v301
    %v645 = vunpack.c.l.b16 %v302
    %v646 = vunpack.c.h.b16 %v302
    %v647 = vunpack.c.l.b16 %v303
    %v648 = vunpack.c.l.b16 %v304
    %v649 = vunpack.c.h.b16 %v304
    %v650 = vunpack.c.l.b16 %v305
    %v651 = vunpack.c.h.b16 %v305
    %v652 = vunpack.c.l.b16 %v306
    %v653 = vunpack.c.h.b16 %v306
    %v654 = vunpack.c.l.b16 %v307
    %v655 = vunpack.c.l.b16 %v308
    %v656 = vunpack.c.h.b16 %v308
    %v657 = vunpack.c.l.b16 %v309
    %v658 = vunpack.c.h.b16 %v309
    %v659 = vunpack.c.l.b16 %v310
    %v660 = vunpack.c.h.b16 %v310
    %v661 = vunpack.c.l.b16 %v311
    %v662 = vunpack.c.l.b16 %v312
    %v663 = vunpack.c.h.b16 %v312
    %v664 = vunpack.c.l.b16 %v313
    %v665 = vunpack.c.h.b16 %v313
    %v666 = vunpack.c.l.b16 %v314
    %v667 = vunpack.c.h.b16 %v314
    %v668 = vunpack.c.l.b16 %v315
    %v669 = vunpack.c.l.b16 %v316
    %v670 = vunpack.c.h.b16 %v316
    %v671 = vunpack.c.l.b16 %v317
    %v672 = vunpack.c.h.b16 %v317
    %v673 = vunpack.c.l.b16 %v318
    %v674 = vunpack.c.h.b16 %v318
    %v675 = vunpack.c.l.b16 %v319
    %v676 = vunpack.c.l.b16 %v320
    %v677 = vunpack.c.h.b16 %v320
    %v678 = vunpack.c.l.b16 %v321
    %v679 = vunpack.c.h.b16 %v321
    %v680 = vunpack.c.l.b16 %v322
    %v681 = vunpack.c.h.b16 %v322
    %v682 = vunpack.c.l.b16 %v323
    %v683 = vunpack.c.l.b16 %v324
    %v684 = vunpack.c.h.b16 %v324
    %v685 = vunpack.c.l.b16 %v325
    %v686 = vunpack.c.h.b16 %v325
    %v687 = vunpack.c.l.b16 %v326
    %v688 = vunpack.c.h.b16 %v326
    %v689 = vunpack.c.l.b16 %v327
    %v690 = vunpack.c.l.b16 %v328
    %v691 = vunpack.c.h.b16 %v328
    %v692 = vunpack.c.l.b16 %v329
    %v693 = vunpack.c.h.b16 %v329
    %v694 = vunpack.c.l.b16 %v330
    %v695 = vunpack.c.h.b16 %v330
    %v696 = vunpack.c.l.b16 %v331
    %v697 = vunpack.c.l.b16 %v332
    %v698 = vunpack.c.h.b16 %v332
    %v699 = vunpack.c.l.b16 %v333
    %v700 = vunpack.c.h.b16 %v333
    %v701 = vunpack.c.l.b16 %v334
    %v702 = vunpack.c.h.b16 %v334
    %v703 = vunpack.c.l.b16 %v335
    %v704 = vunpack.c.l.b16 %v336
    %v705 = vunpack.c.h.b16 %v336
    %v706 = vunpack.c.l.b16 %v337
    %v707 = vunpack.c.h.b16 %v337
    %v708 = vunpack.c.l.b16 %v338
    %v709 = vunpack.c.h.b16 %v338
    %v710 = vunpack.c.l.b16 %v339
    %v711 = vunpack.c.l.b16 %v340
    %v712 = vunpack.c.h.b16 %v340
    %v713 = vunpack.c.l.b16 %v341
    %v714 = vunpack.c.h.b16 %v341
    %v715 = vunpack.c.l.b16 %v342
    %v716 = vunpack.c.h.b16 %v342
    %v717 = vunpack.c.l.b16 %v343
    %v718 = vunpack.c.l.b16 %v344
    %v719 = vunpack.c.h.b16 %v344
    %v720 = vunpack.c.l.b16 %v345
    %v721 = vunpack.c.h.b16 %v345
    %v722 = vunpack.c.l.b16 %v346
    %v723 = vunpack.c.h.b16 %v346
    %v724 = vunpack.c.l.b16 %v347
    %v725 = vunpack.c.l.b16 %v348
    %v726 = vunpack.c.h.b16 %v348
    %v727 = vunpack.c.l.b16 %v349
    %v728 = vunpack.c.h.b16 %v349
    %v729 = vunpack.c.l.b16 %v350
    %v730 = vunpack.c.h.b16 %v350
    %v731 = vunpack.c.l.b16 %v351
    %v732 = vunpack.c.l.b16 %v352
    %v733 = vunpack.c.h.b16 %v352
    %v734 = vunpack.c.l.b16 %v353
    %v735 = vunpack.c.h.b16 %v353
    %v736 = vunpack.c.l.b16 %v354
    %v737 = vunpack.c.h.b16 %v354
    %v738 = vunpack.c.l.b16 %v355
    %v739 = vunpack.c.l.b16 %v356
    %v740 = vunpack.c.h.b16 %v356
    %v741 = vunpack.c.l.b16 %v357
    %v742 = vunpack.c.h.b16 %v357
    %v743 = vunpack.c.l.b16 %v358
    %v744 = vunpack.c.h.b16 %v358
    %v745 = vunpack.c.l.b16 %v359
    %v746 = vunpack.c.l.b16 %v360
    %v747 = vunpack.c.h.b16 %v360
    %v748 = vunpack.c.l.b16 %v361
    %v749 = vunpack.c.h.b16 %v361
    %v750 = vunpack.c.l.b16 %v362
    %v751 = vunpack.c.h.b16 %v362
    %v752 = vunpack.c.l.b16 %v363
    %v753 = vpack.c.b16 %v536, %v529
    %v754 = vpack.c.b16 %v537, %v530
    %v755 = vpack.c.b16 %v538, %v531
    %v756 = vpack.c.b16 %v539, %v532
    %v757 = vpack.c.b16 %v540, %v533
    %v758 = vpack.c.b16 %v541, %v534
    %v759 = vpack.c.b16 %v542, %v535
    %v760 = vpack.c.b16 %v550, %v543
    %v761 = vpack.c.b16 %v551, %v544
    %v762 = vpack.c.b16 %v552, %v545
    %v763 = vpack.c.b16 %v553, %v546
    %v764 = vpack.c.b16 %v554, %v547
    %v765 = vpack.c.b16 %v555, %v548
    %v766 = vpack.c.b16 %v556, %v549
    %v767 = vpack.c.b16 %v564, %v557
    %v768 = vpack.c.b16 %v565, %v558
    %v769 = vpack.c.b16 %v566, %v559
    %v770 = vpack.c.b16 %v567, %v560
    %v771 = vpack.c.b16 %v568, %v561
    %v772 = vpack.c.b16 %v569, %v562
    %v773 = vpack.c.b16 %v570, %v563
    %v774 = vpack.c.b16 %v578, %v571
    %v775 = vpack.c.b16 %v579, %v572
    %v776 = vpack.c.b16 %v580, %v573
    %v777 = vpack.c.b16 %v581, %v574
    %v778 = vpack.c.b16 %v582, %v575
    %v779 = vpack.c.b16 %v583, %v576
    %v780 = vpack.c.b16 %v584, %v577
    %v781 = vpack.c.b16 %v592, %v585
    %v782 = vpack.c.b16 %v593, %v586
    %v783 = vpack.c.b16 %v594, %v587
    %v784 = vpack.c.b16 %v595, %v588
    %v785 = vpack.c.b16 %v596, %v589
    %v786 = vpack.c.b16 %v597, %v590
    %v787 = vpack.c.b16 %v598, %v591
    %v788 = vpack.c.b16 %v606, %v599
    %v789 = vpack.c.b16 %v607, %v600
    %v790 = vpack.c.b16 %v608, %v601
    %v791 = vpack.c.b16 %v609, %v602
    %v792 = vpack.c.b16 %v610, %v603
    %v793 = vpack.c.b16 %v611, %v604
    %v794 = vpack.c.b16 %v612, %v605
    %v795 = vpack.c.b16 %v620, %v613
    %v796 = vpack.c.b16 %v621, %v614
    %v797 = vpack.c.b16 %v622, %v615
    %v798 = vpack.c.b16 %v623, %v616
    %v799 = vpack.c.b16 %v624, %v617
    %v800 = vpack.c.b16 %v625, %v618
    %v801 = vpack.c.b16 %v626, %v619
    %v802 = vpack.c.b16 %v634, %v627
    %v803 = vpack.c.b16 %v635, %v628
    %v804 = vpack.c.b16 %v636, %v629
    %v805 = vpack.c.b16 %v637, %v630
    %v806 = vpack.c.b16 %v638, %v631
    %v807 = vpack.c.b16 %v639, %v632
    %v808 = vpack.c.b16 %v640, %v633
    %v809 = vpack.c.b16 %v648, %v641
    %v810 = vpack.c.b16 %v649, %v642
    %v811 = vpack.c.b16 %v650, %v643
    %v812 = vpack.c.b16 %v651, %v644
    %v813 = vpack.c.b16 %v652, %v645
    %v814 = vpack.c.b16 %v653, %v646
    %v815 = vpack.c.b16 %v654, %v647
    %v816 = vpack.c.b16 %v662, %v655
    %v817 = vpack.c.b16 %v663, %v656
    %v818 = vpack.c.b16 %v664, %v657
    %v819 = vpack.c.b16 %v665, %v658
    %v820 = vpack.c.b16 %v666, %v659
    %v821 = vpack.c.b16 %v667, %v660
    %v822 = vpack.c.b16 %v668, %v661
    %v823 = vpack.c.b16 %v676, %v669
    %v824 = vpack.c.b16 %v677, %v670
    %v825 = vpack.c.b16 %v678, %v671
    %v826 = vpack.c.b16 %v679, %v672
    %v827 = vpack.c.b16 %v680, %v673
    %v828 = vpack.c.b16 %v681, %v674
    %v829 = vpack.c.b16 %v682, %v675
    %v830 = vpack.c.b16 %v690, %v683
    %v831 = vpack.c.b16 %v691, %v684
    %v832 = vpack.c.b16 %v692, %v685
    %v833 = vpack.c.b16 %v693, %v686
    %v834 = vpack.c.b16 %v694, %v687
    %v835 = vpack.c.b16 %v695, %v688
    %v836 = vpack.c.b16 %v696, %v689
    %v837 = vpack.c.b16 %v704, %v697
    %v838 = vpack.c.b16 %v705, %v698
    %v839 = vpack.c.b16 %v706, %v699
    %v840 = vpack.c.b16 %v707, %v700
    %v841 = vpack.c.b16 %v708, %v701
    %v842 = vpack.c.b16 %v709, %v702
    %v843 = vpack.c.b16 %v710, %v703
    %v844 = vpack.c.b16 %v718, %v711
    %v845 = vpack.c.b16 %v719, %v712
    %v846 = vpack.c.b16 %v720, %v713
    %v847 = vpack.c.b16 %v721, %v714
    %v848 = vpack.c.b16 %v722, %v715
    %v849 = vpack.c.b16 %v723, %v716
    %v850 = vpack.c.b16 %v724, %v717
    %v851 = vpack.c.b16 %v732, %v725
    %v852 = vpack.c.b16 %v733, %v726
    %v853 = vpack.c.b16 %v734, %v727
    %v854 = vpack.c.b16 %v735, %v728
    %v855 = vpack.c.b16 %v736, %v729
    %v856 = vpack.c.b16 %v737, %v730
    %v857 = vpack.c.b16 %v738, %v731
    %v858 = vpack.c.b16 %v746, %v739
    %v859 = vpack.c.b16 %v747, %v740
    %v860 = vpack.c.b16 %v748, %v741
    %v861 = vpack.c.b16 %v749, %v742
    %v862 = vpack.c.b16 %v750, %v743
    %v863 = vpack.c.b16 %v751, %v744
    %v864 = vpack.c.b16 %v752, %v745
    %977 = vmatprep.subr.bf16.mxu0 %v754
    %978 = vmatpush1.bf16.msra.mxu0 %v753
    %979 = vmatprep.subr.bf16.mxu0 %v761
    %980 = vmatpush1.bf16.msra.mxu0 %v760
    %981 = vmatprep.subr.bf16.mxu0 %v768
    %982 = vmatpush1.bf16.msra.mxu0 %v767
    %983 = vmatprep.subr.bf16.mxu0 %v775
    %984 = vmatpush1.bf16.msra.mxu0 %v774
    %985 = vmatprep.subr.bf16.mxu0 %v782
    %986 = vmatpush1.bf16.msra.mxu0 %v781
    %987 = vmatprep.subr.bf16.mxu0 %v789
    %988 = vmatpush1.bf16.msra.mxu0 %v788
    %989 = vmatprep.subr.bf16.mxu0 %v796
    %990 = vmatpush1.bf16.msra.mxu0 %v795
    %991 = vmatprep.subr.bf16.mxu0 %v803
    %992 = vmatpush1.bf16.msra.mxu0 %v802
    %993 = vmatprep.subr.bf16.mxu0 %v810
    %994 = vmatpush1.bf16.msra.mxu0 %v809
    %995 = vmatprep.subr.bf16.mxu0 %v817
    %996 = vmatpush1.bf16.msra.mxu0 %v816
    %997 = vmatprep.subr.bf16.mxu0 %v824
    %998 = vmatpush1.bf16.msra.mxu0 %v823
    %999 = vmatprep.subr.bf16.mxu0 %v831
    %1000 = vmatpush1.bf16.msra.mxu0 %v830
    %1001 = vmatprep.subr.bf16.mxu0 %v838
    %1002 = vmatpush1.bf16.msra.mxu0 %v837
    %1003 = vmatprep.subr.bf16.mxu0 %v845
    %1004 = vmatpush1.bf16.msra.mxu0 %v844
    %1005 = vmatprep.subr.bf16.mxu0 %v852
    %1006 = vmatpush1.bf16.msra.mxu0 %v851
    %1007 = vmatprep.subr.bf16.mxu0 %v859
    %1008 = vmatpush1.bf16.msra.mxu0 %v858
    %1009 = vmatprep.mubr.bf16.mxu0 %v235
    %1010 = vmatmul.mubr.bf16.gmra.mrb[0].mxu0 %v234
    %v1011 = vpop.f32.mrb[0].mxu0
    %v1012 = vadd.f32 %v369, %v1011
    %v1013 = vpop.f32.mrb[0].mxu0
    %v1014 = vadd.f32 %v373, %v1013
    %v1015 = vpop.f32.mrb[0].mxu0
    %v1016 = vadd.f32 %v369, %v1015
    %v1017 = vpop.f32.mrb[0].mxu0
    %v1018 = vadd.f32 %v373, %v1017
    %1019 = vdwg.mxu0
    %1020 = vmatprep.subr.bf16.mxu0 %v756
    %1021 = vmatpush1.bf16.msra.mxu0 %v755
    %1022 = vmatprep.subr.bf16.mxu0 %v763
    %1023 = vmatpush1.bf16.msra.mxu0 %v762
    %1024 = vmatprep.subr.bf16.mxu0 %v770
    %1025 = vmatpush1.bf16.msra.mxu0 %v769
    %1026 = vmatprep.subr.bf16.mxu0 %v777
    %1027 = vmatpush1.bf16.msra.mxu0 %v776
    %1028 = vmatprep.subr.bf16.mxu0 %v784
    %1029 = vmatpush1.bf16.msra.mxu0 %v783
    %1030 = vmatprep.subr.bf16.mxu0 %v791
    %1031 = vmatpush1.bf16.msra.mxu0 %v790
    %1032 = vmatprep.subr.bf16.mxu0 %v798
    %1033 = vmatpush1.bf16.msra.mxu0 %v797
    %1034 = vmatprep.subr.bf16.mxu0 %v805
    %1035 = vmatpush1.bf16.msra.mxu0 %v804
    %1036 = vmatprep.subr.bf16.mxu0 %v812
    %1037 = vmatpush1.bf16.msra.mxu0 %v811
    %1038 = vmatprep.subr.bf16.mxu0 %v819
    %1039 = vmatpush1.bf16.msra.mxu0 %v818
    %1040 = vmatprep.subr.bf16.mxu0 %v826
    %1041 = vmatpush1.bf16.msra.mxu0 %v825
    %1042 = vmatprep.subr.bf16.mxu0 %v833
    %1043 = vmatpush1.bf16.msra.mxu0 %v832
    %1044 = vmatprep.subr.bf16.mxu0 %v840
    %1045 = vmatpush1.bf16.msra.mxu0 %v839
    %1046 = vmatprep.subr.bf16.mxu0 %v847
    %1047 = vmatpush1.bf16.msra.mxu0 %v846
    %1048 = vmatprep.subr.bf16.mxu0 %v854
    %1049 = vmatpush1.bf16.msra.mxu0 %v853
    %1050 = vmatprep.subr.bf16.mxu0 %v861
    %1051 = vmatpush1.bf16.msra.mxu0 %v860
    %1052 = vmatprep.mubr.bf16.mxu0 %v235
    %1053 = vmatmul.mubr.bf16.gmra.mrb[0].mxu0 %v234
    %v1054 = vpop.f32.mrb[0].mxu0
    %v1055 = vadd.f32 %v377, %v1054
    %v1056 = vpop.f32.mrb[0].mxu0
    %v1057 = vadd.f32 %v381, %v1056
    %v1058 = vpop.f32.mrb[0].mxu0
    %v1059 = vadd.f32 %v377, %v1058
    %v1060 = vpop.f32.mrb[0].mxu0
    %v1061 = vadd.f32 %v381, %v1060
    %1062 = vdwg.mxu0
    %1063 = vmatprep.subr.bf16.mxu0 %v758
    %1064 = vmatpush1.bf16.msra.mxu0 %v757
    %1065 = vmatprep.subr.bf16.mxu0 %v765
    %1066 = vmatpush1.bf16.msra.mxu0 %v764
    %1067 = vmatprep.subr.bf16.mxu0 %v772
    %1068 = vmatpush1.bf16.msra.mxu0 %v771
    %1069 = vmatprep.subr.bf16.mxu0 %v779
    %1070 = vmatpush1.bf16.msra.mxu0 %v778
    %1071 = vmatprep.subr.bf16.mxu0 %v786
    %1072 = vmatpush1.bf16.msra.mxu0 %v785
    %1073 = vmatprep.subr.bf16.mxu0 %v793
    %1074 = vmatpush1.bf16.msra.mxu0 %v792
    %1075 = vmatprep.subr.bf16.mxu0 %v800
    %1076 = vmatpush1.bf16.msra.mxu0 %v799
    %1077 = vmatprep.subr.bf16.mxu0 %v807
    %1078 = vmatpush1.bf16.msra.mxu0 %v806
    %1079 = vmatprep.subr.bf16.mxu0 %v814
    %1080 = vmatpush1.bf16.msra.mxu0 %v813
    %1081 = vmatprep.subr.bf16.mxu0 %v821
    %1082 = vmatpush1.bf16.msra.mxu0 %v820
    %1083 = vmatprep.subr.bf16.mxu0 %v828
    %1084 = vmatpush1.bf16.msra.mxu0 %v827
    %1085 = vmatprep.subr.bf16.mxu0 %v835
    %1086 = vmatpush1.bf16.msra.mxu0 %v834
    %1087 = vmatprep.subr.bf16.mxu0 %v842
    %1088 = vmatpush1.bf16.msra.mxu0 %v841
    %1089 = vmatprep.subr.bf16.mxu0 %v849
    %1090 = vmatpush1.bf16.msra.mxu0 %v848
    %1091 = vmatprep.subr.bf16.mxu0 %v856
    %1092 = vmatpush1.bf16.msra.mxu0 %v855
    %1093 = vmatprep.subr.bf16.mxu0 %v863
    %1094 = vmatpush1.bf16.msra.mxu0 %v862
    %1095 = vmatprep.mubr.bf16.mxu0 %v235
    %1096 = vmatmul.mubr.bf16.gmra.mrb[0].mxu0 %v234
    %v1097 = vpop.f32.mrb[0].mxu0
    %v1098 = vadd.f32 %v385, %v1097
    %v1099 = vpop.f32.mrb[0].mxu0
    %v1100 = vadd.f32 %v389, %v1099
    %v1101 = vpop.f32.mrb[0].mxu0
    %v1102 = vadd.f32 %v385, %v1101
    %v1103 = vpop.f32.mrb[0].mxu0
    %v1104 = vadd.f32 %v389, %v1103
    %1105 = vdwg.mxu0
    %1106 = vmatprep.subr.bf16.mxu0 0
    %1107 = vmatpush1.bf16.msra.mxu0 %v759
    %1108 = vmatprep.subr.bf16.mxu0 0
    %1109 = vmatpush1.bf16.msra.mxu0 %v766
    %1110 = vmatprep.subr.bf16.mxu0 0
    %1111 = vmatpush1.bf16.msra.mxu0 %v773
    %1112 = vmatprep.subr.bf16.mxu0 0
    %1113 = vmatpush1.bf16.msra.mxu0 %v780
    %1114 = vmatprep.subr.bf16.mxu0 0
    %1115 = vmatpush1.bf16.msra.mxu0 %v787
    %1116 = vmatprep.subr.bf16.mxu0 0
    %1117 = vmatpush1.bf16.msra.mxu0 %v794
    %1118 = vmatprep.subr.bf16.mxu0 0
    %1119 = vmatpush1.bf16.msra.mxu0 %v801
    %1120 = vmatprep.subr.bf16.mxu0 0
    %1121 = vmatpush1.bf16.msra.mxu0 %v808
    %1122 = vmatprep.subr.bf16.mxu0 0
    %1123 = vmatpush1.bf16.msra.mxu0 %v815
    %1124 = vmatprep.subr.bf16.mxu0 0
    %1125 = vmatpush1.bf16.msra.mxu0 %v822
    %1126 = vmatprep.subr.bf16.mxu0 0
    %1127 = vmatpush1.bf16.msra.mxu0 %v829
    %1128 = vmatprep.subr.bf16.mxu0 0
    %1129 = vmatpush1.bf16.msra.mxu0 %v836
    %1130 = vmatprep.subr.bf16.mxu0 0
    %1131 = vmatpush1.bf16.msra.mxu0 %v843
    %1132 = vmatprep.subr.bf16.mxu0 0
    %1133 = vmatpush1.bf16.msra.mxu0 %v850
    %1134 = vmatprep.subr.bf16.mxu0 0
    %1135 = vmatpush1.bf16.msra.mxu0 %v857
    %1136 = vmatprep.subr.bf16.mxu0 0
    %1137 = vmatpush1.bf16.msra.mxu0 %v864
    %1138 = vmatprep.mubr.bf16.mxu0 %v235
    %1139 = vmatmul.mubr.bf16.gmra.mrb[0].mxu0 %v234
    %v1140 = vpop.f32.mrb[0].mxu0
    %v1141 = vadd.f32 %v393, %v1140
    %v1142 = vpop.f32.mrb[0].mxu0
    %v1143 = vpop.f32.mrb[0].mxu0
    %v1144 = vadd.f32 %v393, %v1143
    %v1145 = vpop.f32.mrb[0].mxu0
    %1146 = vdwg.mxu0
    %v1147 = vtanh.pop %v1012
    %v1148 = vtanh.pop %v1014
    %v1149 = vtanh.pop %v1055
    %v1150 = vtanh.pop %v1057
    %v1151 = vtanh.pop %v1098
    %v1152 = vtanh.pop %v1100
    %v1153 = vtanh.pop %v1141
    %v1154 = vtanh.pop %v1016
    %v1155 = vtanh.pop %v1018
    %v1156 = vtanh.pop %v1059
    %v1157 = vtanh.pop %v1061
    %v1158 = vtanh.pop %v1102
    %v1159 = vtanh.pop %v1104
    %v1160 = vtanh.pop %v1144
    %1161 = vst [vmem:[#allocation8] sm:$0xff] %v1147
    %1162 = vst [vmem:[#allocation8 + $0x8] sm:$0xff] %v1148
    %1163 = vst [vmem:[#allocation8 + $0x10] sm:$0xff] %v1149
    %1164 = vst [vmem:[#allocation8 + $0x18] sm:$0xff] %v1150
    %1165 = vst [vmem:[#allocation8 + $0x20] sm:$0xff] %v1151
    %1166 = vst [vmem:[#allocation8 + $0x28] sm:$0xff] %v1152
    %1167 = vst [vmem:[#allocation8 + $0x30] sm:$0xff] %v1153
    %1168 = vst [vmem:[#allocation8 + $0x38] sm:$0xff] %v1154
    %1169 = vst [vmem:[#allocation8 + $0x40] sm:$0xff] %v1155
    %1170 = vst [vmem:[#allocation8 + $0x48] sm:$0xff] %v1156
    %1171 = vst [vmem:[#allocation8 + $0x50] sm:$0xff] %v1157
    %1172 = vst [vmem:[#allocation8 + $0x58] sm:$0xff] %v1158
    %1173 = vst [vmem:[#allocation8 + $0x60] sm:$0xff] %v1159
    %1174 = vst [vmem:[#allocation8 + $0x68] sm:$0xff] %v1160
    // Predicated region
    $region34: #{tpu_custom_call.1} parent=1 // pred_check
      _
    $region35: #{tpu_custom_call.1} parent=1 // pred_check_branch
      %1176 = sbr.rel (0) target = $region37
    $region36: #{tpu_custom_call.1} parent=1 // pred_region
      %s1178 = ssub.s32 1792, 1792
      %1179 = vsyncadd [#allocation4], %s1178
      %s1180 = sshll.u32 [#allocation8], 4
      %s1181 = int_to_ptr.vmem [resolvable:$true] %s1180
      %1186 = dma.vmem_to_hbm [thread:$0]  %s1181, 1792, %s5, [#allocation4], 896, 896, 56
    $region37: #{tpu_custom_call.1} parent=1 // pred_fallthru
      _
    // Predicated region
    $region38: #{tpu_custom_call.1} parent=1 // pred_check
      _
    $region39: #{tpu_custom_call.1} parent=1 // pred_check_branch
      %1188 = sbr.rel (0) target = $region41
    $region40: #{tpu_custom_call.1} parent=1 // pred_region
      %1189 = dma.done [#allocation4], 1792
    $region41: #{tpu_custom_call.1} parent=1 // pred_fallthru
      _
    %1190 = vsyncpa [#allocation3], 1
    %1191 = vsyncpa [#allocation6], 1
    %1192 = vsyncpa [#allocation4], 1

</llo_original>
